<compile_context>
chip_gen: v5e
topology: v5e:2x2
jax: 0.10.0
libtpu: 0.0.40
codegen_flags: <defaults>
</compile_context>

<pallas_src>
import functools
import math

import jax
import jax.numpy as jnp
from jax.experimental import pallas as pl
from jax.experimental.pallas import tpu as pltpu


def _cdiv(a, b):
    return -(-a // b)


def _num_tensorcores_per_chip():
    # Only v7x exposes 2 TensorCores per chip to one Pallas grid; on v5e/v6e
    # the grid is a sequential loop, so extra steps are pure overhead.
    try:
        kind = jax.devices()[0].device_kind.lower()
    except Exception:
        return 1
    return 2 if "7" in kind else 1


def _choose_rowpair_tile(n_rowpairs, w2, c2_in, n_out, in_isz, out_isz, num_tc):
    """Number of image-row-pairs per grid step (VMEM-budgeted, gen-gated)."""
    # When tiled (>1 step) the output block's second-minor dim (tr*w2) must be
    # a multiple of 8 sublanes -> tr must be a multiple of `mult`.
    mult = 8 // math.gcd(w2, 8)
    # Per-row-pair VMEM cost of one pipeline buffer (even + odd input, output)
    io = w2 * (2 * c2_in * in_isz + n_out * out_isz)
    # plus in-kernel f32 temporaries (xe, xo, y) that spill to VMEM scratch.
    tmp = w2 * (2 * c2_in + n_out) * 4
    # Resident parameters (assume double-buffered by the pipeline).
    param_bytes = 2 * (2 * c2_in + 1) * n_out * 4
    budget = max(28 * 2**20 - param_bytes, 4 * 2**20)   # v7x-safe budget
    cap = max(1, budget // (2 * io + tmp))
    # ~2048 merged tokens per step amortizes the ~0.35us/step overhead and
    # sits on the flat part of the measured HBM-roofline tile sweep.
    target = max(1, 2048 // max(w2, 1))
    tr = max(1, min(n_rowpairs, cap, target))
    if num_tc >= 2:
        # Keep both TensorCores busy: at least (and an even number of) steps.
        steps = max(2, _cdiv(n_rowpairs, tr))
        steps += steps % 2
        tr = _cdiv(n_rowpairs, steps)
    if tr >= n_rowpairs:
        return n_rowpairs                       # single full block
    tr = max(mult, tr // mult * mult)           # sublane granularity
    if tr >= n_rowpairs:
        return n_rowpairs
    if num_tc >= 2:
        # Nudge down (bounded) so the step count stays even when possible.
        t = tr
        while t >= mult and _cdiv(n_rowpairs, t) % 2:
            t -= mult
        if t >= mult:
            tr = t
    return tr


def patch_merging_kernel(xe_ref, xo_ref, we_ref, wo_ref, bias_ref, o_ref, *,
                         eps, inv_c4):
    # xe_ref/xo_ref: (TR, W2, 2c) halves of each merged 4c token:
    #   even image row -> [x(2i,2j)   | x(2i,2j+1)  ]   (ref's x0|x1)
    #   odd  image row -> [x(2i+1,2j) | x(2i+1,2j+1)]   (ref's x2|x3)
    xe = xe_ref[...].astype(jnp.float32)
    xo = xo_ref[...].astype(jnp.float32)
    tr, w2, c2 = xe.shape
    xe = xe.reshape(tr * w2, c2)
    xo = xo.reshape(tr * w2, c2)

    # One-pass LayerNorm statistics over the virtual 4c channel axis.
    s = jnp.sum(xe, axis=-1, keepdims=True) + jnp.sum(xo, axis=-1, keepdims=True)
    sq = (jnp.sum(xe * xe, axis=-1, keepdims=True)
          + jnp.sum(xo * xo, axis=-1, keepdims=True))
    mu = s * inv_c4
    var = sq * inv_c4 - mu * mu
    r = jax.lax.rsqrt(var + eps)                       # (TR*W2, 1)

    # (xn*g + b) @ W + bias == r * ((x - mu) @ (g[:,None]*W)) + (b @ W + bias)
    # gamma/beta/bias are pre-folded into we/wo/bias by the wrapper; the
    # per-row scale r commutes with the matmul, so it is applied in the
    # narrower output space.
    y = jnp.dot(xe - mu, we_ref[...], preferred_element_type=jnp.float32)
    y = y + jnp.dot(xo - mu, wo_ref[...], preferred_element_type=jnp.float32)
    o_ref[...] = (y * r + bias_ref[...]).astype(o_ref.dtype)


def patch_merging(x, params, *, resolution, eps=1e-5):
    h, w = resolution
    b, n, c = x.shape
    assert n == h * w and h % 2 == 0 and w % 2 == 0
    c2_in, c4, c2_out = 2 * c, 4 * c, 2 * c
    h2, w2 = h // 2, w // 2
    rp = b * h2                     # image-row pairs
    tokens = rp * w2                # merged tokens

    # Free view (pure reshape, no transpose / extra HBM round trip):
    # xv[r, 0, j, :] = [x0|x1] and xv[r, 1, j, :] = [x2|x3] of the reference.
    xv = x.reshape(rp, 2, w2, c2_in)

    # Fold the LayerNorm affine into the reduction weights (once, tiny).
    gamma = params["gamma"].reshape(c4, 1).astype(jnp.float32)
    beta = params["beta"].reshape(1, c4).astype(jnp.float32)
    wmat = params["w"].astype(jnp.float32)
    bias = params["bias"].reshape(1, c2_out).astype(jnp.float32)
    w_eff = gamma * wmat                       # (4c, 2c)
    bias_eff = beta @ wmat + bias              # (1, 2c)

    # Lane-dense output: pad output width to 128 with zero columns when
    # 2c < 128 (sliced off below).  No-op for standard Swin dims.
    n_pad = 128 if c2_out < 128 else c2_out
    if n_pad != c2_out:
        w_eff = jnp.pad(w_eff, ((0, 0), (0, n_pad - c2_out)))
        bias_eff = jnp.pad(bias_eff, ((0, 0), (0, n_pad - c2_out)))
    w_e, w_o = w_eff[:c2_in], w_eff[c2_in:]    # even / odd image-row halves

    num_tc = _num_tensorcores_per_chip()
    tr = _choose_rowpair_tile(rp, w2, c2_in, n_pad,
                              x.dtype.itemsize, x.dtype.itemsize, num_tc)
    n_steps = pl.cdiv(rp, tr)

    # Explicit VMEM budget (matters on v7x: 64 MiB physical, 32 MiB default).
    vmem_est = (2 * 2 * tr * w2 * c2_in * x.dtype.itemsize    # input tiles x2
                + 2 * tr * w2 * n_pad * x.dtype.itemsize      # output tiles
                + 2 * (2 * c2_in + 1) * n_pad * 4             # params
                + 2 * tr * w2 * (2 * c2_in + n_pad) * 4)      # f32 temporaries
    cp_kwargs = dict(dimension_semantics=("parallel",))
    if vmem_est > 12 * 2**20:
        cp_kwargs["vmem_limit_bytes"] = int(min(48 * 2**20,
                                                vmem_est + 8 * 2**20))

    out2d = pl.pallas_call(
        functools.partial(patch_merging_kernel, eps=eps, inv_c4=1.0 / c4),
        out_shape=jax.ShapeDtypeStruct((tokens, n_pad), x.dtype),
        grid=(n_steps,),
        in_specs=[
            # even image rows of each row pair -> [x0|x1] channel half
            pl.BlockSpec((tr, None, w2, c2_in), lambda i: (i, 0, 0, 0)),
            # odd image rows of each row pair  -> [x2|x3] channel half
            pl.BlockSpec((tr, None, w2, c2_in), lambda i: (i, 1, 0, 0)),
            # parameters: constant index maps -> DMA'd once, kept resident
            pl.BlockSpec((c2_in, n_pad), lambda i: (0, 0)),
            pl.BlockSpec((c2_in, n_pad), lambda i: (0, 0)),
            pl.BlockSpec((1, n_pad), lambda i: (0, 0)),
        ],
        out_specs=pl.BlockSpec((tr * w2, n_pad), lambda i: (i, 0)),
        compiler_params=pltpu.CompilerParams(**cp_kwargs),
    )(xv, xv, w_e, w_o, bias_eff)

    if n_pad != c2_out:
        out2d = out2d[:, :c2_out]
    return out2d.reshape(b, h2 * w2, c2_out)


# ---------------- pure-JAX reference (mirrors the PyTorch forward) --------
def patch_merging_ref(x, params, *, resolution):
    h, w = resolution
    b, n, c = x.shape
    xr = x.reshape(b, h, w, c)
    x0 = xr[:, 0::2, 0::2, :]
    x1 = xr[:, 0::2, 1::2, :]
    x2 = xr[:, 1::2, 0::2, :]
    x3 = xr[:, 1::2, 1::2, :]
    xm = jnp.concatenate([x0, x1, x2, x3], axis=-1).reshape(b, -1, 4 * c)
    mu = jnp.mean(xm, axis=-1, keepdims=True)
    var = jnp.mean(jnp.square(xm - mu), axis=-1, keepdims=True)
    xn = (xm - mu) * jax.lax.rsqrt(var + 1e-5)
    xn = xn * params["gamma"] + params["beta"]
    return xn @ params["w"] + params["bias"]


if __name__ == "__main__":
    # PatchMerging(input_resolution=(16,16), dim=32): (b, h*w, c) -> (b, h*w/4, 2c)
    dim = 32
    resolution = (16, 16)
    batch = 2

    key = jax.random.PRNGKey(0)
    kx, kg, kb, kw, kbi = jax.random.split(key, 5)
    x = jax.random.normal(
        kx, (batch, resolution[0] * resolution[1], dim), jnp.float32)
    params = {
        "gamma": 1.0 + 0.1 * jax.random.normal(kg, (1, 4 * dim), jnp.float32),
        "beta": 0.1 * jax.random.normal(kb, (1, 4 * dim), jnp.float32),
        "w": 0.02 * jax.random.normal(kw, (4 * dim, 2 * dim), jnp.float32),
        "bias": 0.02 * jax.random.normal(kbi, (1, 2 * dim), jnp.float32),
    }

    pm = jax.jit(patch_merging, static_argnames=("resolution",))
    out = jax.block_until_ready(pm(x, params, resolution=resolution))

    ref = patch_merging_ref(x, params, resolution=resolution)
    assert out.shape == ref.shape == (
        batch, resolution[0] * resolution[1] // 4, 2 * dim), out.shape
    max_err = float(jnp.max(jnp.abs(out - ref)))
    assert jnp.allclose(out, ref, atol=1e-4, rtol=1e-4), max_err

    print("KERNEL_OK")
</pallas_src>

<mosaic_0001>
module attributes {stable_mosaic.version = 11 : i64} {
  func.func @patch_merging_kernel(%arg0: i32, %arg1: memref<16x1x8x64xf32, #tpu.memory_space<vmem>>, %arg2: memref<16x1x8x64xf32, #tpu.memory_space<vmem>>, %arg3: memref<64x128xf32, #tpu.memory_space<vmem>>, %arg4: memref<64x128xf32, #tpu.memory_space<vmem>>, %arg5: memref<1x128xf32, #tpu.memory_space<vmem>>, %arg6: memref<128x128xf32, #tpu.memory_space<vmem>>) attributes {dimension_semantics = [#tpu.dimension_semantics<parallel>], iteration_bounds = array<i64: 1>, scalar_prefetch = 0 : i64, scratch_operands = 0 : i64, tpu.core_type = #tpu.core_type<tc>, window_params = [{transform_indices = @transform_0, window_bounds = array<i64: 16, 1, 8, 64>}, {transform_indices = @transform_1, window_bounds = array<i64: 16, 1, 8, 64>}, {pipeline_mode = #tpu.pipeline_mode<synchronous>, transform_indices = @transform_2, window_bounds = array<i64: 64, 128>}, {pipeline_mode = #tpu.pipeline_mode<synchronous>, transform_indices = @transform_3, window_bounds = array<i64: 64, 128>}, {pipeline_mode = #tpu.pipeline_mode<synchronous>, transform_indices = @transform_4, window_bounds = array<i64: 1, 128>}, {transform_indices = @transform_5, window_bounds = array<i64: 128, 128>}]} {
    %c0 = arith.constant 0 : index
    %c0_0 = arith.constant 0 : index
    %c0_1 = arith.constant 0 : index
    %c0_2 = arith.constant 0 : index
    %0 = vector.load %arg1[%c0, %c0_0, %c0_1, %c0_2] : memref<16x1x8x64xf32, #tpu.memory_space<vmem>>, vector<16x1x8x64xf32>
    %1 = vector.shape_cast %0 : vector<16x1x8x64xf32> to vector<16x8x64xf32>
    %c0_3 = arith.constant 0 : index
    %c0_4 = arith.constant 0 : index
    %c0_5 = arith.constant 0 : index
    %c0_6 = arith.constant 0 : index
    %2 = vector.load %arg2[%c0_3, %c0_4, %c0_5, %c0_6] : memref<16x1x8x64xf32, #tpu.memory_space<vmem>>, vector<16x1x8x64xf32>
    %3 = vector.shape_cast %2 : vector<16x1x8x64xf32> to vector<16x8x64xf32>
    %4 = vector.shape_cast %1 : vector<16x8x64xf32> to vector<128x64xf32>
    %5 = vector.shape_cast %3 : vector<16x8x64xf32> to vector<128x64xf32>
    %cst = arith.constant dense<0.000000e+00> : vector<128xf32>
    %6 = vector.multi_reduction <add>, %4, %cst [1] : vector<128x64xf32> to vector<128xf32>
    %7 = vector.shape_cast %6 : vector<128xf32> to vector<128x1xf32>
    %cst_7 = arith.constant dense<0.000000e+00> : vector<128xf32>
    %8 = vector.multi_reduction <add>, %5, %cst_7 [1] : vector<128x64xf32> to vector<128xf32>
    %9 = vector.shape_cast %8 : vector<128xf32> to vector<128x1xf32>
    %10 = arith.addf %7, %9 : vector<128x1xf32>
    %11 = arith.mulf %4, %4 : vector<128x64xf32>
    %cst_8 = arith.constant dense<0.000000e+00> : vector<128xf32>
    %12 = vector.multi_reduction <add>, %11, %cst_8 [1] : vector<128x64xf32> to vector<128xf32>
    %13 = vector.shape_cast %12 : vector<128xf32> to vector<128x1xf32>
    %14 = arith.mulf %5, %5 : vector<128x64xf32>
    %cst_9 = arith.constant dense<0.000000e+00> : vector<128xf32>
    %15 = vector.multi_reduction <add>, %14, %cst_9 [1] : vector<128x64xf32> to vector<128xf32>
    %16 = vector.shape_cast %15 : vector<128xf32> to vector<128x1xf32>
    %17 = arith.addf %13, %16 : vector<128x1xf32>
    %cst_10 = arith.constant 7.812500e-03 : f32
    %18 = vector.broadcast %cst_10 : f32 to vector<128x1xf32>
    %19 = arith.mulf %10, %18 : vector<128x1xf32>
    %cst_11 = arith.constant 7.812500e-03 : f32
    %20 = vector.broadcast %cst_11 : f32 to vector<128x1xf32>
    %21 = arith.mulf %17, %20 : vector<128x1xf32>
    %22 = arith.mulf %19, %19 : vector<128x1xf32>
    %23 = arith.subf %21, %22 : vector<128x1xf32>
    %cst_12 = arith.constant 9.99999974E-6 : f32
    %24 = vector.broadcast %cst_12 : f32 to vector<128x1xf32>
    %25 = arith.addf %23, %24 : vector<128x1xf32>
    %26 = math.rsqrt %25 : vector<128x1xf32>
    %27 = vector.broadcast %19 : vector<128x1xf32> to vector<128x64xf32>
    %28 = arith.subf %4, %27 : vector<128x64xf32>
    %c0_13 = arith.constant 0 : index
    %c0_14 = arith.constant 0 : index
    %29 = vector.load %arg3[%c0_13, %c0_14] : memref<64x128xf32, #tpu.memory_space<vmem>>, vector<64x128xf32>
    %cst_15 = arith.constant dense<0.000000e+00> : vector<128x128xf32>
    %30 = tpu.matmul %28, %29, %cst_15 {dimension_numbers = #tpu.dot_dimension_numbers<[1], [0], [0], [1], [0, 0, 1, 1], [], []>} : vector<128x64xf32>, vector<64x128xf32>, vector<128x128xf32> -> vector<128x128xf32>
    %31 = vector.broadcast %19 : vector<128x1xf32> to vector<128x64xf32>
    %32 = arith.subf %5, %31 : vector<128x64xf32>
    %c0_16 = arith.constant 0 : index
    %c0_17 = arith.constant 0 : index
    %33 = vector.load %arg4[%c0_16, %c0_17] : memref<64x128xf32, #tpu.memory_space<vmem>>, vector<64x128xf32>
    %cst_18 = arith.constant dense<0.000000e+00> : vector<128x128xf32>
    %34 = tpu.matmul %32, %33, %cst_18 {dimension_numbers = #tpu.dot_dimension_numbers<[1], [0], [0], [1], [0, 0, 1, 1], [], []>} : vector<128x64xf32>, vector<64x128xf32>, vector<128x128xf32> -> vector<128x128xf32>
    %35 = arith.addf %30, %34 : vector<128x128xf32>
    %36 = vector.broadcast %26 : vector<128x1xf32> to vector<128x128xf32>
    %37 = arith.mulf %35, %36 : vector<128x128xf32>
    %c0_19 = arith.constant 0 : index
    %c0_20 = arith.constant 0 : index
    %38 = vector.load %arg5[%c0_19, %c0_20] : memref<1x128xf32, #tpu.memory_space<vmem>>, vector<1x128xf32>
    %39 = vector.broadcast %38 : vector<1x128xf32> to vector<128x128xf32>
    %40 = arith.addf %37, %39 : vector<128x128xf32>
    %c0_21 = arith.constant 0 : index
    %c0_22 = arith.constant 0 : index
    %41 = vector.load %arg6[%c0_21, %c0_22] : memref<128x128xf32, #tpu.memory_space<vmem>>, vector<128x128xf32>
    tpu.vector_store %arg6[%c0_21, %c0_22], %40 {strides = array<i32>} : memref<128x128xf32, #tpu.memory_space<vmem>>, vector<128x128xf32>,
    return
  }
  func.func @transform_0(%arg0: i32) -> (i32, i32, i32, i32) {
    %c0_i32 = arith.constant 0 : i32
    %c0_i32_0 = arith.constant 0 : i32
    %c0_i32_1 = arith.constant 0 : i32
    %c0_i32_2 = arith.constant 0 : i32
    return %arg0, %c0_i32, %c0_i32_0, %c0_i32_1 : i32, i32, i32, i32
  }
  func.func @transform_1(%arg0: i32) -> (i32, i32, i32, i32) {
    %c1_i32 = arith.constant 1 : i32
    %c0_i32 = arith.constant 0 : i32
    %c0_i32_0 = arith.constant 0 : i32
    %c0_i32_1 = arith.constant 0 : i32
    return %arg0, %c1_i32, %c0_i32, %c0_i32_0 : i32, i32, i32, i32
  }
  func.func @transform_2(%arg0: i32) -> (i32, i32) {
    %c0_i32 = arith.constant 0 : i32
    %c0_i32_0 = arith.constant 0 : i32
    %c0_i32_1 = arith.constant 0 : i32
    return %c0_i32, %c0_i32_0 : i32, i32
  }
  func.func @transform_3(%arg0: i32) -> (i32, i32) {
    %c0_i32 = arith.constant 0 : i32
    %c0_i32_0 = arith.constant 0 : i32
    %c0_i32_1 = arith.constant 0 : i32
    return %c0_i32, %c0_i32_0 : i32, i32
  }
  func.func @transform_4(%arg0: i32) -> (i32, i32) {
    %c0_i32 = arith.constant 0 : i32
    %c0_i32_0 = arith.constant 0 : i32
    %c0_i32_1 = arith.constant 0 : i32
    return %c0_i32, %c0_i32_0 : i32, i32
  }
  func.func @transform_5(%arg0: i32) -> (i32, i32) {
    %c0_i32 = arith.constant 0 : i32
    %c0_i32_0 = arith.constant 0 : i32
    return %arg0, %c0_i32 : i32, i32
  }
}

</mosaic_0001>

<llo_original>
// kernel: patch_merging.1
$region0: #{patch_merging.1}
  #allocation0 [shape = 'u32[]', space=smem, size = 0x4, offset = 0x4, fixed_abs, tag = 'smem constant byte address 0x4 - core index']
  #allocation1 [shape = 'u32[72,128]{1,0:T(1,128)}', space=vmem, size = 0x9000, scoped, tag = 'internal scratch']
  %s0 = inlined_call_operand.vmem [shape: f32[16,2,8,64], index: 0, kind: input, shape index: {}, may-alias: {0,1}]
  %s1 = inlined_call_operand.vmem [shape: f32[16,2,8,64], index: 1, kind: input, shape index: {}, may-alias: {0,1}]
  %s2 = inlined_call_operand.vmem [shape: f32[64,128], index: 2, kind: input, shape index: {}]
  %s3 = inlined_call_operand.vmem [shape: f32[64,128], index: 3, kind: input, shape index: {}]
  %s4 = inlined_call_operand.vmem [shape: f32[1,128], index: 4, kind: input, shape index: {}]
  %s5 = inlined_call_operand.hbm [shape: f32[128,128], index: 5, kind: output, shape index: {}]
  %s6 = sld [smem:[#allocation0]]
  $region106: #{patch_merging.1} parent=0
    _
  %s8 = ssub.s32 1, %s6
  %s9 = scalar_select 0, %s8, %s6
  $region1: #{patch_merging.1} parent=0
    #allocation2 [shape = 'u8[65536]{0}', space=vmem, size = 0x10000, scoped, tag = 'input window, operand 0, single buffered']
    #allocation3 [shape = 'u8[65536]{0}', space=vmem, size = 0x10000, scoped, tag = 'input window, operand 1, single buffered']
    #allocation4 [shape = 'u8[65536]{0}', space=vmem, size = 0x10000, scoped, tag = 'output window, operand 0, single buffered']
    #allocation5 [shape = 's32[1]{0}', space=sflag, size = 0x4, scoped, tag = 'scoped memory for patch_merging.1']
    %10 = vsyncpa [#allocation5], 0
    // Predicated region
    $region2: #{patch_merging.1} parent=1 // pred_check
      _
    $region3: #{patch_merging.1} parent=1 // pred_check_branch
      %12 = sbr.rel (0) target = $region5
    $region4: #{patch_merging.1} parent=1 // pred_region
      // Predicated region
      $region6: #{patch_merging.1} parent=4 // pred_check
        _
      $region7: #{patch_merging.1} parent=4 // pred_check_branch
        %14 = sbr.rel (0) target = $region9
      $region8: #{patch_merging.1} parent=4 // pred_region
        // Predicated region
        $region10: #{patch_merging.1} parent=8 // pred_check
          _
        $region11: #{patch_merging.1} parent=8 // pred_check_branch
          %16 = sbr.rel (0) target = $region13
        $region12: #{patch_merging.1} parent=8 // pred_region
          // Predicated region
          $region25: #{patch_merging.1} parent=12 // pred_check
            _
          $region26: #{patch_merging.1} parent=12 // pred_check_branch
            %62 = sbr.rel (0) target = $region28
          $region27: #{patch_merging.1} parent=12 // pred_region
            loop: start=0, step=1, limit=1
            $region29: #{patch_merging.1} parent=27 // loop_pre_header
              _
            $region30: #{patch_merging.1} parent=27 // loop_header
              %s64 = sphi 0, %s68
              %p65 = scmp.ge.s32.totalorder %s64, 1
              %s69 = sphi %s0, %s0
              %s70 = sphi [#allocation2], [#allocation2]
            $region31: #{patch_merging.1} parent=27 // loop_header_branch
              %67 = sbr.rel (%p65) target = $region35
            $region32: #{patch_merging.1} parent=27 // loop_body
              %v71 = vld [vmem:[%s69] sm:$0xff]
              %72 = vst [vmem:[%s70] sm:$0xff] %v71
              %v73 = vld [vmem:[%s69 + $0x10] sm:$0xff]
              %74 = vst [vmem:[%s70 + $0x8] sm:$0xff] %v73
              %v75 = vld [vmem:[%s69 + $0x20] sm:$0xff]
              %76 = vst [vmem:[%s70 + $0x10] sm:$0xff] %v75
              %v77 = vld [vmem:[%s69 + $0x30] sm:$0xff]
              %78 = vst [vmem:[%s70 + $0x18] sm:$0xff] %v77
              %v79 = vld [vmem:[%s69 + $0x40] sm:$0xff]
              %80 = vst [vmem:[%s70 + $0x20] sm:$0xff] %v79
              %v81 = vld [vmem:[%s69 + $0x50] sm:$0xff]
              %82 = vst [vmem:[%s70 + $0x28] sm:$0xff] %v81
              %v83 = vld [vmem:[%s69 + $0x60] sm:$0xff]
              %84 = vst [vmem:[%s70 + $0x30] sm:$0xff] %v83
              %v85 = vld [vmem:[%s69 + $0x70] sm:$0xff]
              %86 = vst [vmem:[%s70 + $0x38] sm:$0xff] %v85
              %v87 = vld [vmem:[%s69 + $0x80] sm:$0xff]
              %88 = vst [vmem:[%s70 + $0x40] sm:$0xff] %v87
              %v89 = vld [vmem:[%s69 + $0x90] sm:$0xff]
              %90 = vst [vmem:[%s70 + $0x48] sm:$0xff] %v89
              %v91 = vld [vmem:[%s69 + $0xa0] sm:$0xff]
              %92 = vst [vmem:[%s70 + $0x50] sm:$0xff] %v91
              %v93 = vld [vmem:[%s69 + $0xb0] sm:$0xff]
              %94 = vst [vmem:[%s70 + $0x58] sm:$0xff] %v93
              %v95 = vld [vmem:[%s69 + $0xc0] sm:$0xff]
              %96 = vst [vmem:[%s70 + $0x60] sm:$0xff] %v95
              %v97 = vld [vmem:[%s69 + $0xd0] sm:$0xff]
              %98 = vst [vmem:[%s70 + $0x68] sm:$0xff] %v97
              %v99 = vld [vmem:[%s69 + $0xe0] sm:$0xff]
              %100 = vst [vmem:[%s70 + $0x70] sm:$0xff] %v99
              %v101 = vld [vmem:[%s69 + $0xf0] sm:$0xff]
              %102 = vst [vmem:[%s70 + $0x78] sm:$0xff] %v101
            $region33: #{patch_merging.1} parent=27 // loop_footer
              %s68 = sadd.s32 1, %s64
            $region34: #{patch_merging.1} parent=27 // loop_footer_branch
              %63 = sbr.rel target = $region30
            $region35: #{patch_merging.1} parent=27 // loop_exit
              _
          $region28: #{patch_merging.1} parent=12 // pred_fallthru
            _
          // Predicated region
          $region36: #{patch_merging.1} parent=12 // pred_check
            _
          $region37: #{patch_merging.1} parent=12 // pred_check_branch
            %104 = sbr.rel target = $region39
          $region38: #{patch_merging.1} parent=12 // pred_region
            _
          $region39: #{patch_merging.1} parent=12 // pred_fallthru
            _
        $region13: #{patch_merging.1} parent=8 // pred_fallthru
          _
        // Predicated region
        $region14: #{patch_merging.1} parent=8 // pred_check
          _
        $region15: #{patch_merging.1} parent=8 // pred_check_branch
          %18 = sbr.rel target = $region17
        $region16: #{patch_merging.1} parent=8 // pred_region
          %s20 = ssub.s32 256, 1
          loop: start=0, step=1, limit=1
          $region18: #{patch_merging.1} parent=16 // loop_pre_header
            _
          $region19: #{patch_merging.1} parent=16 // loop_header
            %s22 = sphi 0, %s26
            %p23 = scmp.ge.s32.totalorder %s22, 1
            %s27 = sphi %s0, %s0
            %s28 = sphi [#allocation2], [#allocation2]
          $region20: #{patch_merging.1} parent=16 // loop_header_branch
            %25 = sbr.rel (%p23) target = $region24
          $region21: #{patch_merging.1} parent=16 // loop_body
            %v29 = vld [vmem:[%s27] sm:%s20]
            %30 = vst [vmem:[%s28] sm:%s20] %v29
            %v31 = vld [vmem:[%s27 + $0x10] sm:%s20]
            %32 = vst [vmem:[%s28 + $0x8] sm:%s20] %v31
            %v33 = vld [vmem:[%s27 + $0x20] sm:%s20]
            %34 = vst [vmem:[%s28 + $0x10] sm:%s20] %v33
            %v35 = vld [vmem:[%s27 + $0x30] sm:%s20]
            %36 = vst [vmem:[%s28 + $0x18] sm:%s20] %v35
            %v37 = vld [vmem:[%s27 + $0x40] sm:%s20]
            %38 = vst [vmem:[%s28 + $0x20] sm:%s20] %v37
            %v39 = vld [vmem:[%s27 + $0x50] sm:%s20]
            %40 = vst [vmem:[%s28 + $0x28] sm:%s20] %v39
            %v41 = vld [vmem:[%s27 + $0x60] sm:%s20]
            %42 = vst [vmem:[%s28 + $0x30] sm:%s20] %v41
            %v43 = vld [vmem:[%s27 + $0x70] sm:%s20]
            %44 = vst [vmem:[%s28 + $0x38] sm:%s20] %v43
            %v45 = vld [vmem:[%s27 + $0x80] sm:%s20]
            %46 = vst [vmem:[%s28 + $0x40] sm:%s20] %v45
            %v47 = vld [vmem:[%s27 + $0x90] sm:%s20]
            %48 = vst [vmem:[%s28 + $0x48] sm:%s20] %v47
            %v49 = vld [vmem:[%s27 + $0xa0] sm:%s20]
            %50 = vst [vmem:[%s28 + $0x50] sm:%s20] %v49
            %v51 = vld [vmem:[%s27 + $0xb0] sm:%s20]
            %52 = vst [vmem:[%s28 + $0x58] sm:%s20] %v51
            %v53 = vld [vmem:[%s27 + $0xc0] sm:%s20]
            %54 = vst [vmem:[%s28 + $0x60] sm:%s20] %v53
            %v55 = vld [vmem:[%s27 + $0xd0] sm:%s20]
            %56 = vst [vmem:[%s28 + $0x68] sm:%s20] %v55
            %v57 = vld [vmem:[%s27 + $0xe0] sm:%s20]
            %58 = vst [vmem:[%s28 + $0x70] sm:%s20] %v57
            %v59 = vld [vmem:[%s27 + $0xf0] sm:%s20]
            %60 = vst [vmem:[%s28 + $0x78] sm:%s20] %v59
          $region22: #{patch_merging.1} parent=16 // loop_footer
            %s26 = sadd.s32 1, %s22
          $region23: #{patch_merging.1} parent=16 // loop_footer_branch
            %21 = sbr.rel target = $region19
          $region24: #{patch_merging.1} parent=16 // loop_exit
            _
        $region17: #{patch_merging.1} parent=8 // pred_fallthru
          _
      $region9: #{patch_merging.1} parent=4 // pred_fallthru
        _
      %105 = vnop
    $region5: #{patch_merging.1} parent=1 // pred_fallthru
      _
    // Predicated region
    $region40: #{patch_merging.1} parent=1 // pred_check
      _
    $region41: #{patch_merging.1} parent=1 // pred_check_branch
      %107 = sbr.rel (0) target = $region43
    $region42: #{patch_merging.1} parent=1 // pred_region
      %s108 = scalar_lea.vmem %s1, 8
      // Predicated region
      $region44: #{patch_merging.1} parent=42 // pred_check
        _
      $region45: #{patch_merging.1} parent=42 // pred_check_branch
        %110 = sbr.rel (0) target = $region47
      $region46: #{patch_merging.1} parent=42 // pred_region
        // Predicated region
        $region48: #{patch_merging.1} parent=46 // pred_check
          _
        $region49: #{patch_merging.1} parent=46 // pred_check_branch
          %112 = sbr.rel (0) target = $region51
        $region50: #{patch_merging.1} parent=46 // pred_region
          // Predicated region
          $region63: #{patch_merging.1} parent=50 // pred_check
            _
          $region64: #{patch_merging.1} parent=50 // pred_check_branch
            %158 = sbr.rel (0) target = $region66
          $region65: #{patch_merging.1} parent=50 // pred_region
            loop: start=0, step=1, limit=1
            $region67: #{patch_merging.1} parent=65 // loop_pre_header
              _
            $region68: #{patch_merging.1} parent=65 // loop_header
              %s160 = sphi 0, %s164
              %p161 = scmp.ge.s32.totalorder %s160, 1
              %s165 = sphi %s108, %s108
              %s166 = sphi [#allocation3], [#allocation3]
            $region69: #{patch_merging.1} parent=65 // loop_header_branch
              %163 = sbr.rel (%p161) target = $region73
            $region70: #{patch_merging.1} parent=65 // loop_body
              %v167 = vld [vmem:[%s165] sm:$0xff]
              %168 = vst [vmem:[%s166] sm:$0xff] %v167
              %v169 = vld [vmem:[%s165 + $0x10] sm:$0xff]
              %170 = vst [vmem:[%s166 + $0x8] sm:$0xff] %v169
              %v171 = vld [vmem:[%s165 + $0x20] sm:$0xff]
              %172 = vst [vmem:[%s166 + $0x10] sm:$0xff] %v171
              %v173 = vld [vmem:[%s165 + $0x30] sm:$0xff]
              %174 = vst [vmem:[%s166 + $0x18] sm:$0xff] %v173
              %v175 = vld [vmem:[%s165 + $0x40] sm:$0xff]
              %176 = vst [vmem:[%s166 + $0x20] sm:$0xff] %v175
              %v177 = vld [vmem:[%s165 + $0x50] sm:$0xff]
              %178 = vst [vmem:[%s166 + $0x28] sm:$0xff] %v177
              %v179 = vld [vmem:[%s165 + $0x60] sm:$0xff]
              %180 = vst [vmem:[%s166 + $0x30] sm:$0xff] %v179
              %v181 = vld [vmem:[%s165 + $0x70] sm:$0xff]
              %182 = vst [vmem:[%s166 + $0x38] sm:$0xff] %v181
              %v183 = vld [vmem:[%s165 + $0x80] sm:$0xff]
              %184 = vst [vmem:[%s166 + $0x40] sm:$0xff] %v183
              %v185 = vld [vmem:[%s165 + $0x90] sm:$0xff]
              %186 = vst [vmem:[%s166 + $0x48] sm:$0xff] %v185
              %v187 = vld [vmem:[%s165 + $0xa0] sm:$0xff]
              %188 = vst [vmem:[%s166 + $0x50] sm:$0xff] %v187
              %v189 = vld [vmem:[%s165 + $0xb0] sm:$0xff]
              %190 = vst [vmem:[%s166 + $0x58] sm:$0xff] %v189
              %v191 = vld [vmem:[%s165 + $0xc0] sm:$0xff]
              %192 = vst [vmem:[%s166 + $0x60] sm:$0xff] %v191
              %v193 = vld [vmem:[%s165 + $0xd0] sm:$0xff]
              %194 = vst [vmem:[%s166 + $0x68] sm:$0xff] %v193
              %v195 = vld [vmem:[%s165 + $0xe0] sm:$0xff]
              %196 = vst [vmem:[%s166 + $0x70] sm:$0xff] %v195
              %v197 = vld [vmem:[%s165 + $0xf0] sm:$0xff]
              %198 = vst [vmem:[%s166 + $0x78] sm:$0xff] %v197
            $region71: #{patch_merging.1} parent=65 // loop_footer
              %s164 = sadd.s32 1, %s160
            $region72: #{patch_merging.1} parent=65 // loop_footer_branch
              %159 = sbr.rel target = $region68
            $region73: #{patch_merging.1} parent=65 // loop_exit
              _
          $region66: #{patch_merging.1} parent=50 // pred_fallthru
            _
          // Predicated region
          $region74: #{patch_merging.1} parent=50 // pred_check
            _
          $region75: #{patch_merging.1} parent=50 // pred_check_branch
            %200 = sbr.rel target = $region77
          $region76: #{patch_merging.1} parent=50 // pred_region
            _
          $region77: #{patch_merging.1} parent=50 // pred_fallthru
            _
        $region51: #{patch_merging.1} parent=46 // pred_fallthru
          _
        // Predicated region
        $region52: #{patch_merging.1} parent=46 // pred_check
          _
        $region53: #{patch_merging.1} parent=46 // pred_check_branch
          %114 = sbr.rel target = $region55
        $region54: #{patch_merging.1} parent=46 // pred_region
          %s116 = ssub.s32 256, 1
          loop: start=0, step=1, limit=1
          $region56: #{patch_merging.1} parent=54 // loop_pre_header
            _
          $region57: #{patch_merging.1} parent=54 // loop_header
            %s118 = sphi 0, %s122
            %p119 = scmp.ge.s32.totalorder %s118, 1
            %s123 = sphi %s108, %s108
            %s124 = sphi [#allocation3], [#allocation3]
          $region58: #{patch_merging.1} parent=54 // loop_header_branch
            %121 = sbr.rel (%p119) target = $region62
          $region59: #{patch_merging.1} parent=54 // loop_body
            %v125 = vld [vmem:[%s123] sm:%s116]
            %126 = vst [vmem:[%s124] sm:%s116] %v125
            %v127 = vld [vmem:[%s123 + $0x10] sm:%s116]
            %128 = vst [vmem:[%s124 + $0x8] sm:%s116] %v127
            %v129 = vld [vmem:[%s123 + $0x20] sm:%s116]
            %130 = vst [vmem:[%s124 + $0x10] sm:%s116] %v129
            %v131 = vld [vmem:[%s123 + $0x30] sm:%s116]
            %132 = vst [vmem:[%s124 + $0x18] sm:%s116] %v131
            %v133 = vld [vmem:[%s123 + $0x40] sm:%s116]
            %134 = vst [vmem:[%s124 + $0x20] sm:%s116] %v133
            %v135 = vld [vmem:[%s123 + $0x50] sm:%s116]
            %136 = vst [vmem:[%s124 + $0x28] sm:%s116] %v135
            %v137 = vld [vmem:[%s123 + $0x60] sm:%s116]
            %138 = vst [vmem:[%s124 + $0x30] sm:%s116] %v137
            %v139 = vld [vmem:[%s123 + $0x70] sm:%s116]
            %140 = vst [vmem:[%s124 + $0x38] sm:%s116] %v139
            %v141 = vld [vmem:[%s123 + $0x80] sm:%s116]
            %142 = vst [vmem:[%s124 + $0x40] sm:%s116] %v141
            %v143 = vld [vmem:[%s123 + $0x90] sm:%s116]
            %144 = vst [vmem:[%s124 + $0x48] sm:%s116] %v143
            %v145 = vld [vmem:[%s123 + $0xa0] sm:%s116]
            %146 = vst [vmem:[%s124 + $0x50] sm:%s116] %v145
            %v147 = vld [vmem:[%s123 + $0xb0] sm:%s116]
            %148 = vst [vmem:[%s124 + $0x58] sm:%s116] %v147
            %v149 = vld [vmem:[%s123 + $0xc0] sm:%s116]
            %150 = vst [vmem:[%s124 + $0x60] sm:%s116] %v149
            %v151 = vld [vmem:[%s123 + $0xd0] sm:%s116]
            %152 = vst [vmem:[%s124 + $0x68] sm:%s116] %v151
            %v153 = vld [vmem:[%s123 + $0xe0] sm:%s116]
            %154 = vst [vmem:[%s124 + $0x70] sm:%s116] %v153
            %v155 = vld [vmem:[%s123 + $0xf0] sm:%s116]
            %156 = vst [vmem:[%s124 + $0x78] sm:%s116] %v155
          $region60: #{patch_merging.1} parent=54 // loop_footer
            %s122 = sadd.s32 1, %s118
          $region61: #{patch_merging.1} parent=54 // loop_footer_branch
            %117 = sbr.rel target = $region57
          $region62: #{patch_merging.1} parent=54 // loop_exit
            _
        $region55: #{patch_merging.1} parent=46 // pred_fallthru
          _
      $region47: #{patch_merging.1} parent=42 // pred_fallthru
        _
      %201 = vnop
    $region43: #{patch_merging.1} parent=1 // pred_fallthru
      _
    // Predicated region
    $region78: #{patch_merging.1} parent=1 // pred_check
      _
    $region79: #{patch_merging.1} parent=1 // pred_check_branch
      %203 = sbr.rel (0) target = $region81
    $region80: #{patch_merging.1} parent=1 // pred_region
      _
    $region81: #{patch_merging.1} parent=1 // pred_fallthru
      _
    // Predicated region
    $region82: #{patch_merging.1} parent=1 // pred_check
      _
    $region83: #{patch_merging.1} parent=1 // pred_check_branch
      %205 = sbr.rel (0) target = $region85
    $region84: #{patch_merging.1} parent=1 // pred_region
      _
    $region85: #{patch_merging.1} parent=1 // pred_fallthru
      _
    // Predicated region
    $region86: #{patch_merging.1} parent=1 // pred_check
      _
    $region87: #{patch_merging.1} parent=1 // pred_check_branch
      %207 = sbr.rel (0) target = $region89
    $region88: #{patch_merging.1} parent=1 // pred_region
      _
    $region89: #{patch_merging.1} parent=1 // pred_fallthru
      _
    // Predicated region
    $region90: #{patch_merging.1} parent=1 // pred_check
      _
    $region91: #{patch_merging.1} parent=1 // pred_check_branch
      %209 = sbr.rel (0) target = $region93
    $region92: #{patch_merging.1} parent=1 // pred_region
      _
    $region93: #{patch_merging.1} parent=1 // pred_fallthru
      _
    // Predicated region
    $region94: #{patch_merging.1} parent=1 // pred_check
      _
    $region95: #{patch_merging.1} parent=1 // pred_check_branch
      %211 = sbr.rel (0) target = $region97
    $region96: #{patch_merging.1} parent=1 // pred_region
      _
    $region97: #{patch_merging.1} parent=1 // pred_fallthru
      _
    %v212 = vld [vmem:[#allocation2] sm:$0xff]
    %v213 = vld [vmem:[#allocation2 + $0x8] sm:$0xff]
    %v214 = vld [vmem:[#allocation2 + $0x10] sm:$0xff]
    %v215 = vld [vmem:[#allocation2 + $0x18] sm:$0xff]
    %v216 = vld [vmem:[#allocation2 + $0x20] sm:$0xff]
    %v217 = vld [vmem:[#allocation2 + $0x28] sm:$0xff]
    %v218 = vld [vmem:[#allocation2 + $0x30] sm:$0xff]
    %v219 = vld [vmem:[#allocation2 + $0x38] sm:$0xff]
    %v220 = vld [vmem:[#allocation2 + $0x40] sm:$0xff]
    %v221 = vld [vmem:[#allocation2 + $0x48] sm:$0xff]
    %v222 = vld [vmem:[#allocation2 + $0x50] sm:$0xff]
    %v223 = vld [vmem:[#allocation2 + $0x58] sm:$0xff]
    %v224 = vld [vmem:[#allocation2 + $0x60] sm:$0xff]
    %v225 = vld [vmem:[#allocation2 + $0x68] sm:$0xff]
    %v226 = vld [vmem:[#allocation2 + $0x70] sm:$0xff]
    %v227 = vld [vmem:[#allocation2 + $0x78] sm:$0xff]
    %v228 = vld [vmem:[#allocation3] sm:$0xff]
    %v229 = vld [vmem:[#allocation3 + $0x8] sm:$0xff]
    %v230 = vld [vmem:[#allocation3 + $0x10] sm:$0xff]
    %v231 = vld [vmem:[#allocation3 + $0x18] sm:$0xff]
    %v232 = vld [vmem:[#allocation3 + $0x20] sm:$0xff]
    %v233 = vld [vmem:[#allocation3 + $0x28] sm:$0xff]
    %v234 = vld [vmem:[#allocation3 + $0x30] sm:$0xff]
    %v235 = vld [vmem:[#allocation3 + $0x38] sm:$0xff]
    %v236 = vld [vmem:[#allocation3 + $0x40] sm:$0xff]
    %v237 = vld [vmem:[#allocation3 + $0x48] sm:$0xff]
    %v238 = vld [vmem:[#allocation3 + $0x50] sm:$0xff]
    %v239 = vld [vmem:[#allocation3 + $0x58] sm:$0xff]
    %v240 = vld [vmem:[#allocation3 + $0x60] sm:$0xff]
    %v241 = vld [vmem:[#allocation3 + $0x68] sm:$0xff]
    %v242 = vld [vmem:[#allocation3 + $0x70] sm:$0xff]
    %v243 = vld [vmem:[#allocation3 + $0x78] sm:$0xff]
    %vm244 = vcmask 523264
    %v245 = vsel %vm244, %v212, 0.0
    %246 = vadd.xlane.f32.xlu0 %v245
    %v247 = vpop.xlane.xlu0 %246
    %v248 = vsel %vm244, %v213, 0.0
    %249 = vadd.xlane.f32.xlu0 %v248
    %v250 = vpop.xlane.xlu0 %249
    %v251 = vsel %vm244, %v214, 0.0
    %252 = vadd.xlane.f32.xlu0 %v251
    %v253 = vpop.xlane.xlu0 %252
    %v254 = vsel %vm244, %v215, 0.0
    %255 = vadd.xlane.f32.xlu0 %v254
    %v256 = vpop.xlane.xlu0 %255
    %v257 = vsel %vm244, %v216, 0.0
    %258 = vadd.xlane.f32.xlu0 %v257
    %v259 = vpop.xlane.xlu0 %258
    %v260 = vsel %vm244, %v217, 0.0
    %261 = vadd.xlane.f32.xlu0 %v260
    %v262 = vpop.xlane.xlu0 %261
    %v263 = vsel %vm244, %v218, 0.0
    %264 = vadd.xlane.f32.xlu0 %v263
    %v265 = vpop.xlane.xlu0 %264
    %v266 = vsel %vm244, %v219, 0.0
    %267 = vadd.xlane.f32.xlu0 %v266
    %v268 = vpop.xlane.xlu0 %267
    %v269 = vsel %vm244, %v220, 0.0
    %270 = vadd.xlane.f32.xlu0 %v269
    %v271 = vpop.xlane.xlu0 %270
    %v272 = vsel %vm244, %v221, 0.0
    %273 = vadd.xlane.f32.xlu0 %v272
    %v274 = vpop.xlane.xlu0 %273
    %v275 = vsel %vm244, %v222, 0.0
    %276 = vadd.xlane.f32.xlu0 %v275
    %v277 = vpop.xlane.xlu0 %276
    %v278 = vsel %vm244, %v223, 0.0
    %279 = vadd.xlane.f32.xlu0 %v278
    %v280 = vpop.xlane.xlu0 %279
    %v281 = vsel %vm244, %v224, 0.0
    %282 = vadd.xlane.f32.xlu0 %v281
    %v283 = vpop.xlane.xlu0 %282
    %v284 = vsel %vm244, %v225, 0.0
    %285 = vadd.xlane.f32.xlu0 %v284
    %v286 = vpop.xlane.xlu0 %285
    %v287 = vsel %vm244, %v226, 0.0
    %288 = vadd.xlane.f32.xlu0 %v287
    %v289 = vpop.xlane.xlu0 %288
    %v290 = vsel %vm244, %v227, 0.0
    %291 = vadd.xlane.f32.xlu0 %v290
    %v292 = vpop.xlane.xlu0 %291
    %v293 = vsel %vm244, %v228, 0.0
    %294 = vadd.xlane.f32.xlu0 %v293
    %v295 = vpop.xlane.xlu0 %294
    %v296 = vsel %vm244, %v229, 0.0
    %297 = vadd.xlane.f32.xlu0 %v296
    %v298 = vpop.xlane.xlu0 %297
    %v299 = vsel %vm244, %v230, 0.0
    %300 = vadd.xlane.f32.xlu0 %v299
    %v301 = vpop.xlane.xlu0 %300
    %v302 = vsel %vm244, %v231, 0.0
    %303 = vadd.xlane.f32.xlu0 %v302
    %v304 = vpop.xlane.xlu0 %303
    %v305 = vsel %vm244, %v232, 0.0
    %306 = vadd.xlane.f32.xlu0 %v305
    %v307 = vpop.xlane.xlu0 %306
    %v308 = vsel %vm244, %v233, 0.0
    %309 = vadd.xlane.f32.xlu0 %v308
    %v310 = vpop.xlane.xlu0 %309
    %v311 = vsel %vm244, %v234, 0.0
    %312 = vadd.xlane.f32.xlu0 %v311
    %v313 = vpop.xlane.xlu0 %312
    %v314 = vsel %vm244, %v235, 0.0
    %315 = vadd.xlane.f32.xlu0 %v314
    %v316 = vpop.xlane.xlu0 %315
    %v317 = vsel %vm244, %v236, 0.0
    %318 = vadd.xlane.f32.xlu0 %v317
    %v319 = vpop.xlane.xlu0 %318
    %v320 = vsel %vm244, %v237, 0.0
    %321 = vadd.xlane.f32.xlu0 %v320
    %v322 = vpop.xlane.xlu0 %321
    %v323 = vsel %vm244, %v238, 0.0
    %324 = vadd.xlane.f32.xlu0 %v323
    %v325 = vpop.xlane.xlu0 %324
    %v326 = vsel %vm244, %v239, 0.0
    %327 = vadd.xlane.f32.xlu0 %v326
    %v328 = vpop.xlane.xlu0 %327
    %v329 = vsel %vm244, %v240, 0.0
    %330 = vadd.xlane.f32.xlu0 %v329
    %v331 = vpop.xlane.xlu0 %330
    %v332 = vsel %vm244, %v241, 0.0
    %333 = vadd.xlane.f32.xlu0 %v332
    %v334 = vpop.xlane.xlu0 %333
    %v335 = vsel %vm244, %v242, 0.0
    %336 = vadd.xlane.f32.xlu0 %v335
    %v337 = vpop.xlane.xlu0 %336
    %v338 = vsel %vm244, %v243, 0.0
    %339 = vadd.xlane.f32.xlu0 %v338
    %v340 = vpop.xlane.xlu0 %339
    %v341 = vadd.f32 %v247, %v295
    %v342 = vadd.f32 %v250, %v298
    %v343 = vadd.f32 %v253, %v301
    %v344 = vadd.f32 %v256, %v304
    %v345 = vadd.f32 %v259, %v307
    %v346 = vadd.f32 %v262, %v310
    %v347 = vadd.f32 %v265, %v313
    %v348 = vadd.f32 %v268, %v316
    %v349 = vadd.f32 %v271, %v319
    %v350 = vadd.f32 %v274, %v322
    %v351 = vadd.f32 %v277, %v325
    %v352 = vadd.f32 %v280, %v328
    %v353 = vadd.f32 %v283, %v331
    %v354 = vadd.f32 %v286, %v334
    %v355 = vadd.f32 %v289, %v337
    %v356 = vadd.f32 %v292, %v340
    %v357 = vmul.f32 %v212, %v212
    %v358 = vmul.f32 %v213, %v213
    %v359 = vmul.f32 %v214, %v214
    %v360 = vmul.f32 %v215, %v215
    %v361 = vmul.f32 %v216, %v216
    %v362 = vmul.f32 %v217, %v217
    %v363 = vmul.f32 %v218, %v218
    %v364 = vmul.f32 %v219, %v219
    %v365 = vmul.f32 %v220, %v220
    %v366 = vmul.f32 %v221, %v221
    %v367 = vmul.f32 %v222, %v222
    %v368 = vmul.f32 %v223, %v223
    %v369 = vmul.f32 %v224, %v224
    %v370 = vmul.f32 %v225, %v225
    %v371 = vmul.f32 %v226, %v226
    %v372 = vmul.f32 %v227, %v227
    %v373 = vsel %vm244, %v357, 0.0
    %374 = vadd.xlane.f32.xlu0 %v373
    %v375 = vpop.xlane.xlu0 %374
    %v376 = vsel %vm244, %v358, 0.0
    %377 = vadd.xlane.f32.xlu0 %v376
    %v378 = vpop.xlane.xlu0 %377
    %v379 = vsel %vm244, %v359, 0.0
    %380 = vadd.xlane.f32.xlu0 %v379
    %v381 = vpop.xlane.xlu0 %380
    %v382 = vsel %vm244, %v360, 0.0
    %383 = vadd.xlane.f32.xlu0 %v382
    %v384 = vpop.xlane.xlu0 %383
    %v385 = vsel %vm244, %v361, 0.0
    %386 = vadd.xlane.f32.xlu0 %v385
    %v387 = vpop.xlane.xlu0 %386
    %v388 = vsel %vm244, %v362, 0.0
    %389 = vadd.xlane.f32.xlu0 %v388
    %v390 = vpop.xlane.xlu0 %389
    %v391 = vsel %vm244, %v363, 0.0
    %392 = vadd.xlane.f32.xlu0 %v391
    %v393 = vpop.xlane.xlu0 %392
    %v394 = vsel %vm244, %v364, 0.0
    %395 = vadd.xlane.f32.xlu0 %v394
    %v396 = vpop.xlane.xlu0 %395
    %v397 = vsel %vm244, %v365, 0.0
    %398 = vadd.xlane.f32.xlu0 %v397
    %v399 = vpop.xlane.xlu0 %398
    %v400 = vsel %vm244, %v366, 0.0
    %401 = vadd.xlane.f32.xlu0 %v400
    %v402 = vpop.xlane.xlu0 %401
    %v403 = vsel %vm244, %v367, 0.0
    %404 = vadd.xlane.f32.xlu0 %v403
    %v405 = vpop.xlane.xlu0 %404
    %v406 = vsel %vm244, %v368, 0.0
    %407 = vadd.xlane.f32.xlu0 %v406
    %v408 = vpop.xlane.xlu0 %407
    %v409 = vsel %vm244, %v369, 0.0
    %410 = vadd.xlane.f32.xlu0 %v409
    %v411 = vpop.xlane.xlu0 %410
    %v412 = vsel %vm244, %v370, 0.0
    %413 = vadd.xlane.f32.xlu0 %v412
    %v414 = vpop.xlane.xlu0 %413
    %v415 = vsel %vm244, %v371, 0.0
    %416 = vadd.xlane.f32.xlu0 %v415
    %v417 = vpop.xlane.xlu0 %416
    %v418 = vsel %vm244, %v372, 0.0
    %419 = vadd.xlane.f32.xlu0 %v418
    %v420 = vpop.xlane.xlu0 %419
    %v421 = vmul.f32 %v228, %v228
    %v422 = vmul.f32 %v229, %v229
    %v423 = vmul.f32 %v230, %v230
    %v424 = vmul.f32 %v231, %v231
    %v425 = vmul.f32 %v232, %v232
    %v426 = vmul.f32 %v233, %v233
    %v427 = vmul.f32 %v234, %v234
    %v428 = vmul.f32 %v235, %v235
    %v429 = vmul.f32 %v236, %v236
    %v430 = vmul.f32 %v237, %v237
    %v431 = vmul.f32 %v238, %v238
    %v432 = vmul.f32 %v239, %v239
    %v433 = vmul.f32 %v240, %v240
    %v434 = vmul.f32 %v241, %v241
    %v435 = vmul.f32 %v242, %v242
    %v436 = vmul.f32 %v243, %v243
    %v437 = vsel %vm244, %v421, 0.0
    %438 = vadd.xlane.f32.xlu0 %v437
    %v439 = vpop.xlane.xlu0 %438
    %v440 = vsel %vm244, %v422, 0.0
    %441 = vadd.xlane.f32.xlu0 %v440
    %v442 = vpop.xlane.xlu0 %441
    %v443 = vsel %vm244, %v423, 0.0
    %444 = vadd.xlane.f32.xlu0 %v443
    %v445 = vpop.xlane.xlu0 %444
    %v446 = vsel %vm244, %v424, 0.0
    %447 = vadd.xlane.f32.xlu0 %v446
    %v448 = vpop.xlane.xlu0 %447
    %v449 = vsel %vm244, %v425, 0.0
    %450 = vadd.xlane.f32.xlu0 %v449
    %v451 = vpop.xlane.xlu0 %450
    %v452 = vsel %vm244, %v426, 0.0
    %453 = vadd.xlane.f32.xlu0 %v452
    %v454 = vpop.xlane.xlu0 %453
    %v455 = vsel %vm244, %v427, 0.0
    %456 = vadd.xlane.f32.xlu0 %v455
    %v457 = vpop.xlane.xlu0 %456
    %v458 = vsel %vm244, %v428, 0.0
    %459 = vadd.xlane.f32.xlu0 %v458
    %v460 = vpop.xlane.xlu0 %459
    %v461 = vsel %vm244, %v429, 0.0
    %462 = vadd.xlane.f32.xlu0 %v461
    %v463 = vpop.xlane.xlu0 %462
    %v464 = vsel %vm244, %v430, 0.0
    %465 = vadd.xlane.f32.xlu0 %v464
    %v466 = vpop.xlane.xlu0 %465
    %v467 = vsel %vm244, %v431, 0.0
    %468 = vadd.xlane.f32.xlu0 %v467
    %v469 = vpop.xlane.xlu0 %468
    %v470 = vsel %vm244, %v432, 0.0
    %471 = vadd.xlane.f32.xlu0 %v470
    %v472 = vpop.xlane.xlu0 %471
    %v473 = vsel %vm244, %v433, 0.0
    %474 = vadd.xlane.f32.xlu0 %v473
    %v475 = vpop.xlane.xlu0 %474
    %v476 = vsel %vm244, %v434, 0.0
    %477 = vadd.xlane.f32.xlu0 %v476
    %v478 = vpop.xlane.xlu0 %477
    %v479 = vsel %vm244, %v435, 0.0
    %480 = vadd.xlane.f32.xlu0 %v479
    %v481 = vpop.xlane.xlu0 %480
    %v482 = vsel %vm244, %v436, 0.0
    %483 = vadd.xlane.f32.xlu0 %v482
    %v484 = vpop.xlane.xlu0 %483
    %v485 = vadd.f32 %v375, %v439
    %v486 = vadd.f32 %v378, %v442
    %v487 = vadd.f32 %v381, %v445
    %v488 = vadd.f32 %v384, %v448
    %v489 = vadd.f32 %v387, %v451
    %v490 = vadd.f32 %v390, %v454
    %v491 = vadd.f32 %v393, %v457
    %v492 = vadd.f32 %v396, %v460
    %v493 = vadd.f32 %v399, %v463
    %v494 = vadd.f32 %v402, %v466
    %v495 = vadd.f32 %v405, %v469
    %v496 = vadd.f32 %v408, %v472
    %v497 = vadd.f32 %v411, %v475
    %v498 = vadd.f32 %v414, %v478
    %v499 = vadd.f32 %v417, %v481
    %v500 = vadd.f32 %v420, %v484
    %v501 = vmul.f32 %v341, 0.0078125
    %v502 = vmul.f32 %v342, 0.0078125
    %v503 = vmul.f32 %v343, 0.0078125
    %v504 = vmul.f32 %v344, 0.0078125
    %v505 = vmul.f32 %v345, 0.0078125
    %v506 = vmul.f32 %v346, 0.0078125
    %v507 = vmul.f32 %v347, 0.0078125
    %v508 = vmul.f32 %v348, 0.0078125
    %v509 = vmul.f32 %v349, 0.0078125
    %v510 = vmul.f32 %v350, 0.0078125
    %v511 = vmul.f32 %v351, 0.0078125
    %v512 = vmul.f32 %v352, 0.0078125
    %v513 = vmul.f32 %v353, 0.0078125
    %v514 = vmul.f32 %v354, 0.0078125
    %v515 = vmul.f32 %v355, 0.0078125
    %v516 = vmul.f32 %v356, 0.0078125
    %v517 = vmul.f32 %v485, 0.0078125
    %v518 = vmul.f32 %v486, 0.0078125
    %v519 = vmul.f32 %v487, 0.0078125
    %v520 = vmul.f32 %v488, 0.0078125
    %v521 = vmul.f32 %v489, 0.0078125
    %v522 = vmul.f32 %v490, 0.0078125
    %v523 = vmul.f32 %v491, 0.0078125
    %v524 = vmul.f32 %v492, 0.0078125
    %v525 = vmul.f32 %v493, 0.0078125
    %v526 = vmul.f32 %v494, 0.0078125
    %v527 = vmul.f32 %v495, 0.0078125
    %v528 = vmul.f32 %v496, 0.0078125
    %v529 = vmul.f32 %v497, 0.0078125
    %v530 = vmul.f32 %v498, 0.0078125
    %v531 = vmul.f32 %v499, 0.0078125
    %v532 = vmul.f32 %v500, 0.0078125
    %v533 = vmul.f32 %v501, %v501
    %v534 = vmul.f32 %v502, %v502
    %v535 = vmul.f32 %v503, %v503
    %v536 = vmul.f32 %v504, %v504
    %v537 = vmul.f32 %v505, %v505
    %v538 = vmul.f32 %v506, %v506
    %v539 = vmul.f32 %v507, %v507
    %v540 = vmul.f32 %v508, %v508
    %v541 = vmul.f32 %v509, %v509
    %v542 = vmul.f32 %v510, %v510
    %v543 = vmul.f32 %v511, %v511
    %v544 = vmul.f32 %v512, %v512
    %v545 = vmul.f32 %v513, %v513
    %v546 = vmul.f32 %v514, %v514
    %v547 = vmul.f32 %v515, %v515
    %v548 = vmul.f32 %v516, %v516
    %v549 = vsub.f32 %v517, %v533
    %v550 = vsub.f32 %v518, %v534
    %v551 = vsub.f32 %v519, %v535
    %v552 = vsub.f32 %v520, %v536
    %v553 = vsub.f32 %v521, %v537
    %v554 = vsub.f32 %v522, %v538
    %v555 = vsub.f32 %v523, %v539
    %v556 = vsub.f32 %v524, %v540
    %v557 = vsub.f32 %v525, %v541
    %v558 = vsub.f32 %v526, %v542
    %v559 = vsub.f32 %v527, %v543
    %v560 = vsub.f32 %v528, %v544
    %v561 = vsub.f32 %v529, %v545
    %v562 = vsub.f32 %v530, %v546
    %v563 = vsub.f32 %v531, %v547
    %v564 = vsub.f32 %v532, %v548
    %v565 = vadd.f32 %v549, 1e-05
    %v566 = vadd.f32 %v550, 1e-05
    %v567 = vadd.f32 %v551, 1e-05
    %v568 = vadd.f32 %v552, 1e-05
    %v569 = vadd.f32 %v553, 1e-05
    %v570 = vadd.f32 %v554, 1e-05
    %v571 = vadd.f32 %v555, 1e-05
    %v572 = vadd.f32 %v556, 1e-05
    %v573 = vadd.f32 %v557, 1e-05
    %v574 = vadd.f32 %v558, 1e-05
    %v575 = vadd.f32 %v559, 1e-05
    %v576 = vadd.f32 %v560, 1e-05
    %v577 = vadd.f32 %v561, 1e-05
    %v578 = vadd.f32 %v562, 1e-05
    %v579 = vadd.f32 %v563, 1e-05
    %v580 = vadd.f32 %v564, 1e-05
    %v581 = vrsqrt.pop %v565
    %v582 = vmul.f32 %v581, %v565
    %v583 = vmul.f32 %v582, %v581
    %v584 = vmul.f32 0.5, %v583
    %v585 = vsub.f32 1.5, %v584
    %v586 = vmul.f32 %v581, %v585
    %vm587 = vweird.f32 %v565
    %vm588 = vweird.f32 %v581
    %vm589 = vmor %vm587, %vm588
    %v590 = vsel %vm589, %v581, %v586
    %v591 = vrsqrt.pop %v566
    %v592 = vmul.f32 %v591, %v566
    %v593 = vmul.f32 %v592, %v591
    %v594 = vmul.f32 0.5, %v593
    %v595 = vsub.f32 1.5, %v594
    %v596 = vmul.f32 %v591, %v595
    %vm597 = vweird.f32 %v566
    %vm598 = vweird.f32 %v591
    %vm599 = vmor %vm597, %vm598
    %v600 = vsel %vm599, %v591, %v596
    %v601 = vrsqrt.pop %v567
    %v602 = vmul.f32 %v601, %v567
    %v603 = vmul.f32 %v602, %v601
    %v604 = vmul.f32 0.5, %v603
    %v605 = vsub.f32 1.5, %v604
    %v606 = vmul.f32 %v601, %v605
    %vm607 = vweird.f32 %v567
    %vm608 = vweird.f32 %v601
    %vm609 = vmor %vm607, %vm608
    %v610 = vsel %vm609, %v601, %v606
    %v611 = vrsqrt.pop %v568
    %v612 = vmul.f32 %v611, %v568
    %v613 = vmul.f32 %v612, %v611
    %v614 = vmul.f32 0.5, %v613
    %v615 = vsub.f32 1.5, %v614
    %v616 = vmul.f32 %v611, %v615
    %vm617 = vweird.f32 %v568
    %vm618 = vweird.f32 %v611
    %vm619 = vmor %vm617, %vm618
    %v620 = vsel %vm619, %v611, %v616
    %v621 = vrsqrt.pop %v569
    %v622 = vmul.f32 %v621, %v569
    %v623 = vmul.f32 %v622, %v621
    %v624 = vmul.f32 0.5, %v623
    %v625 = vsub.f32 1.5, %v624
    %v626 = vmul.f32 %v621, %v625
    %vm627 = vweird.f32 %v569
    %vm628 = vweird.f32 %v621
    %vm629 = vmor %vm627, %vm628
    %v630 = vsel %vm629, %v621, %v626
    %v631 = vrsqrt.pop %v570
    %v632 = vmul.f32 %v631, %v570
    %v633 = vmul.f32 %v632, %v631
    %v634 = vmul.f32 0.5, %v633
    %v635 = vsub.f32 1.5, %v634
    %v636 = vmul.f32 %v631, %v635
    %vm637 = vweird.f32 %v570
    %vm638 = vweird.f32 %v631
    %vm639 = vmor %vm637, %vm638
    %v640 = vsel %vm639, %v631, %v636
    %v641 = vrsqrt.pop %v571
    %v642 = vmul.f32 %v641, %v571
    %v643 = vmul.f32 %v642, %v641
    %v644 = vmul.f32 0.5, %v643
    %v645 = vsub.f32 1.5, %v644
    %v646 = vmul.f32 %v641, %v645
    %vm647 = vweird.f32 %v571
    %vm648 = vweird.f32 %v641
    %vm649 = vmor %vm647, %vm648
    %v650 = vsel %vm649, %v641, %v646
    %v651 = vrsqrt.pop %v572
    %v652 = vmul.f32 %v651, %v572
    %v653 = vmul.f32 %v652, %v651
    %v654 = vmul.f32 0.5, %v653
    %v655 = vsub.f32 1.5, %v654
    %v656 = vmul.f32 %v651, %v655
    %vm657 = vweird.f32 %v572
    %vm658 = vweird.f32 %v651
    %vm659 = vmor %vm657, %vm658
    %v660 = vsel %vm659, %v651, %v656
    %v661 = vrsqrt.pop %v573
    %v662 = vmul.f32 %v661, %v573
    %v663 = vmul.f32 %v662, %v661
    %v664 = vmul.f32 0.5, %v663
    %v665 = vsub.f32 1.5, %v664
    %v666 = vmul.f32 %v661, %v665
    %vm667 = vweird.f32 %v573
    %vm668 = vweird.f32 %v661
    %vm669 = vmor %vm667, %vm668
    %v670 = vsel %vm669, %v661, %v666
    %v671 = vrsqrt.pop %v574
    %v672 = vmul.f32 %v671, %v574
    %v673 = vmul.f32 %v672, %v671
    %v674 = vmul.f32 0.5, %v673
    %v675 = vsub.f32 1.5, %v674
    %v676 = vmul.f32 %v671, %v675
    %vm677 = vweird.f32 %v574
    %vm678 = vweird.f32 %v671
    %vm679 = vmor %vm677, %vm678
    %v680 = vsel %vm679, %v671, %v676
    %v681 = vrsqrt.pop %v575
    %v682 = vmul.f32 %v681, %v575
    %v683 = vmul.f32 %v682, %v681
    %v684 = vmul.f32 0.5, %v683
    %v685 = vsub.f32 1.5, %v684
    %v686 = vmul.f32 %v681, %v685
    %vm687 = vweird.f32 %v575
    %vm688 = vweird.f32 %v681
    %vm689 = vmor %vm687, %vm688
    %v690 = vsel %vm689, %v681, %v686
    %v691 = vrsqrt.pop %v576
    %v692 = vmul.f32 %v691, %v576
    %v693 = vmul.f32 %v692, %v691
    %v694 = vmul.f32 0.5, %v693
    %v695 = vsub.f32 1.5, %v694
    %v696 = vmul.f32 %v691, %v695
    %vm697 = vweird.f32 %v576
    %vm698 = vweird.f32 %v691
    %vm699 = vmor %vm697, %vm698
    %v700 = vsel %vm699, %v691, %v696
    %v701 = vrsqrt.pop %v577
    %v702 = vmul.f32 %v701, %v577
    %v703 = vmul.f32 %v702, %v701
    %v704 = vmul.f32 0.5, %v703
    %v705 = vsub.f32 1.5, %v704
    %v706 = vmul.f32 %v701, %v705
    %vm707 = vweird.f32 %v577
    %vm708 = vweird.f32 %v701
    %vm709 = vmor %vm707, %vm708
    %v710 = vsel %vm709, %v701, %v706
    %v711 = vrsqrt.pop %v578
    %v712 = vmul.f32 %v711, %v578
    %v713 = vmul.f32 %v712, %v711
    %v714 = vmul.f32 0.5, %v713
    %v715 = vsub.f32 1.5, %v714
    %v716 = vmul.f32 %v711, %v715
    %vm717 = vweird.f32 %v578
    %vm718 = vweird.f32 %v711
    %vm719 = vmor %vm717, %vm718
    %v720 = vsel %vm719, %v711, %v716
    %v721 = vrsqrt.pop %v579
    %v722 = vmul.f32 %v721, %v579
    %v723 = vmul.f32 %v722, %v721
    %v724 = vmul.f32 0.5, %v723
    %v725 = vsub.f32 1.5, %v724
    %v726 = vmul.f32 %v721, %v725
    %vm727 = vweird.f32 %v579
    %vm728 = vweird.f32 %v721
    %vm729 = vmor %vm727, %vm728
    %v730 = vsel %vm729, %v721, %v726
    %v731 = vrsqrt.pop %v580
    %v732 = vmul.f32 %v731, %v580
    %v733 = vmul.f32 %v732, %v731
    %v734 = vmul.f32 0.5, %v733
    %v735 = vsub.f32 1.5, %v734
    %v736 = vmul.f32 %v731, %v735
    %vm737 = vweird.f32 %v580
    %vm738 = vweird.f32 %v731
    %vm739 = vmor %vm737, %vm738
    %v740 = vsel %vm739, %v731, %v736
    %v741 = vsub.f32 %v212, %v501
    %v742 = vsub.f32 %v213, %v502
    %v743 = vsub.f32 %v214, %v503
    %v744 = vsub.f32 %v215, %v504
    %v745 = vsub.f32 %v216, %v505
    %v746 = vsub.f32 %v217, %v506
    %v747 = vsub.f32 %v218, %v507
    %v748 = vsub.f32 %v219, %v508
    %v749 = vsub.f32 %v220, %v509
    %v750 = vsub.f32 %v221, %v510
    %v751 = vsub.f32 %v222, %v511
    %v752 = vsub.f32 %v223, %v512
    %v753 = vsub.f32 %v224, %v513
    %v754 = vsub.f32 %v225, %v514
    %v755 = vsub.f32 %v226, %v515
    %v756 = vsub.f32 %v227, %v516
    %v757 = vld [vmem:[%s2] sm:$0xff]
    %v758 = vld [vmem:[%s2 + $0x8] sm:$0xff]
    %v759 = vld [vmem:[%s2 + $0x10] sm:$0xff]
    %v760 = vld [vmem:[%s2 + $0x18] sm:$0xff]
    %v761 = vld [vmem:[%s2 + $0x20] sm:$0xff]
    %v762 = vld [vmem:[%s2 + $0x28] sm:$0xff]
    %v763 = vld [vmem:[%s2 + $0x30] sm:$0xff]
    %v764 = vld [vmem:[%s2 + $0x38] sm:$0xff]
    %v765 = vsub.f32 %v228, %v501
    %v766 = vsub.f32 %v229, %v502
    %v767 = vsub.f32 %v230, %v503
    %v768 = vsub.f32 %v231, %v504
    %v769 = vsub.f32 %v232, %v505
    %v770 = vsub.f32 %v233, %v506
    %v771 = vsub.f32 %v234, %v507
    %v772 = vsub.f32 %v235, %v508
    %v773 = vsub.f32 %v236, %v509
    %v774 = vsub.f32 %v237, %v510
    %v775 = vsub.f32 %v238, %v511
    %v776 = vsub.f32 %v239, %v512
    %v777 = vsub.f32 %v240, %v513
    %v778 = vsub.f32 %v241, %v514
    %v779 = vsub.f32 %v242, %v515
    %v780 = vsub.f32 %v243, %v516
    %v781 = vld [vmem:[%s3] sm:$0xff]
    %v782 = vld [vmem:[%s3 + $0x8] sm:$0xff]
    %v783 = vld [vmem:[%s3 + $0x10] sm:$0xff]
    %v784 = vld [vmem:[%s3 + $0x18] sm:$0xff]
    %v785 = vld [vmem:[%s3 + $0x20] sm:$0xff]
    %v786 = vld [vmem:[%s3 + $0x28] sm:$0xff]
    %v787 = vld [vmem:[%s3 + $0x30] sm:$0xff]
    %v788 = vld [vmem:[%s3 + $0x38] sm:$0xff]
    %v790 = vsel %vm244, %v765, 0
    %v793 = vsel %vm244, %v766, 0
    %v796 = vsel %vm244, %v767, 0
    %v799 = vsel %vm244, %v768, 0
    %v802 = vsel %vm244, %v769, 0
    %v805 = vsel %vm244, %v770, 0
    %v808 = vsel %vm244, %v771, 0
    %v811 = vsel %vm244, %v772, 0
    %v814 = vsel %vm244, %v773, 0
    %v817 = vsel %vm244, %v774, 0
    %v820 = vsel %vm244, %v775, 0
    %v823 = vsel %vm244, %v776, 0
    %v826 = vsel %vm244, %v777, 0
    %v829 = vsel %vm244, %v778, 0
    %v832 = vsel %vm244, %v779, 0
    %v835 = vsel %vm244, %v780, 0
    %837 = vmatpush.msra.mxu0 0.0
    %838 = vmatpush.msra.mxu0 0.0
    %839 = vmatpush.msra.mxu0 0.0
    %840 = vmatpush.msra.mxu0 0.0
    %841 = vmatpush.msra.mxu0 0.0
    %842 = vmatpush.msra.mxu0 0.0
    %843 = vmatpush.msra.mxu0 0.0
    %844 = vmatpush.msra.mxu0 0.0
    %845 = vmatpush.msra.mxu0 %v788
    %846 = vmatpush.msra.mxu0 %v787
    %847 = vmatpush.msra.mxu0 %v786
    %848 = vmatpush.msra.mxu0 %v785
    %849 = vmatpush.msra.mxu0 %v784
    %850 = vmatpush.msra.mxu0 %v783
    %851 = vmatpush.msra.mxu0 %v782
    %852 = vmatpush.msra.mxu0 %v781
    %853 = vmatmul.f32.gmra.mxu0 %v790
    %v854 = vpop.f32.mrf.mxu0
    %v855 = vadd.f32 0.0, %v854
    %856 = vmatmul.f32.gmra.mxu0 %v793
    %v857 = vpop.f32.mrf.mxu0
    %v858 = vadd.f32 0.0, %v857
    %859 = vmatmul.f32.gmra.mxu0 %v796
    %v860 = vpop.f32.mrf.mxu0
    %v861 = vadd.f32 0.0, %v860
    %862 = vmatmul.f32.gmra.mxu0 %v799
    %v863 = vpop.f32.mrf.mxu0
    %v864 = vadd.f32 0.0, %v863
    %865 = vmatmul.f32.gmra.mxu0 %v802
    %v866 = vpop.f32.mrf.mxu0
    %v867 = vadd.f32 0.0, %v866
    %868 = vmatmul.f32.gmra.mxu0 %v805
    %v869 = vpop.f32.mrf.mxu0
    %v870 = vadd.f32 0.0, %v869
    %871 = vmatmul.f32.gmra.mxu0 %v808
    %v872 = vpop.f32.mrf.mxu0
    %v873 = vadd.f32 0.0, %v872
    %874 = vmatmul.f32.gmra.mxu0 %v811
    %v875 = vpop.f32.mrf.mxu0
    %v876 = vadd.f32 0.0, %v875
    %877 = vmatmul.f32.gmra.mxu0 %v814
    %v878 = vpop.f32.mrf.mxu0
    %v879 = vadd.f32 0.0, %v878
    %880 = vmatmul.f32.gmra.mxu0 %v817
    %v881 = vpop.f32.mrf.mxu0
    %v882 = vadd.f32 0.0, %v881
    %883 = vmatmul.f32.gmra.mxu0 %v820
    %v884 = vpop.f32.mrf.mxu0
    %v885 = vadd.f32 0.0, %v884
    %886 = vmatmul.f32.gmra.mxu0 %v823
    %v887 = vpop.f32.mrf.mxu0
    %v888 = vadd.f32 0.0, %v887
    %889 = vmatmul.f32.gmra.mxu0 %v826
    %v890 = vpop.f32.mrf.mxu0
    %v891 = vadd.f32 0.0, %v890
    %892 = vmatmul.f32.gmra.mxu0 %v829
    %v893 = vpop.f32.mrf.mxu0
    %v894 = vadd.f32 0.0, %v893
    %895 = vmatmul.f32.gmra.mxu0 %v832
    %v896 = vpop.f32.mrf.mxu0
    %v897 = vadd.f32 0.0, %v896
    %898 = vmatmul.f32.gmra.mxu0 %v835
    %v899 = vpop.f32.mrf.mxu0
    %v900 = vadd.f32 0.0, %v899
    %901 = vdwg.mxu0
    %v903 = vsel %vm244, %v741, 0
    %v906 = vsel %vm244, %v742, 0
    %v909 = vsel %vm244, %v743, 0
    %v912 = vsel %vm244, %v744, 0
    %v915 = vsel %vm244, %v745, 0
    %v918 = vsel %vm244, %v746, 0
    %v921 = vsel %vm244, %v747, 0
    %v924 = vsel %vm244, %v748, 0
    %v927 = vsel %vm244, %v749, 0
    %v930 = vsel %vm244, %v750, 0
    %v933 = vsel %vm244, %v751, 0
    %v936 = vsel %vm244, %v752, 0
    %v939 = vsel %vm244, %v753, 0
    %v942 = vsel %vm244, %v754, 0
    %v945 = vsel %vm244, %v755, 0
    %v948 = vsel %vm244, %v756, 0
    %950 = vmatpush.msra.mxu0 0.0
    %951 = vmatpush.msra.mxu0 0.0
    %952 = vmatpush.msra.mxu0 0.0
    %953 = vmatpush.msra.mxu0 0.0
    %954 = vmatpush.msra.mxu0 0.0
    %955 = vmatpush.msra.mxu0 0.0
    %956 = vmatpush.msra.mxu0 0.0
    %957 = vmatpush.msra.mxu0 0.0
    %958 = vmatpush.msra.mxu0 %v764
    %959 = vmatpush.msra.mxu0 %v763
    %960 = vmatpush.msra.mxu0 %v762
    %961 = vmatpush.msra.mxu0 %v761
    %962 = vmatpush.msra.mxu0 %v760
    %963 = vmatpush.msra.mxu0 %v759
    %964 = vmatpush.msra.mxu0 %v758
    %965 = vmatpush.msra.mxu0 %v757
    %966 = vmatmul.f32.gmra.mxu0 %v903
    %v967 = vpop.f32.mrf.mxu0
    %v968 = vadd.f32 %v855, %v967
    %969 = vmatmul.f32.gmra.mxu0 %v906
    %v970 = vpop.f32.mrf.mxu0
    %v971 = vadd.f32 %v858, %v970
    %972 = vmatmul.f32.gmra.mxu0 %v909
    %v973 = vpop.f32.mrf.mxu0
    %v974 = vadd.f32 %v861, %v973
    %975 = vmatmul.f32.gmra.mxu0 %v912
    %v976 = vpop.f32.mrf.mxu0
    %v977 = vadd.f32 %v864, %v976
    %978 = vmatmul.f32.gmra.mxu0 %v915
    %v979 = vpop.f32.mrf.mxu0
    %v980 = vadd.f32 %v867, %v979
    %981 = vmatmul.f32.gmra.mxu0 %v918
    %v982 = vpop.f32.mrf.mxu0
    %v983 = vadd.f32 %v870, %v982
    %984 = vmatmul.f32.gmra.mxu0 %v921
    %v985 = vpop.f32.mrf.mxu0
    %v986 = vadd.f32 %v873, %v985
    %987 = vmatmul.f32.gmra.mxu0 %v924
    %v988 = vpop.f32.mrf.mxu0
    %v989 = vadd.f32 %v876, %v988
    %990 = vmatmul.f32.gmra.mxu0 %v927
    %v991 = vpop.f32.mrf.mxu0
    %v992 = vadd.f32 %v879, %v991
    %993 = vmatmul.f32.gmra.mxu0 %v930
    %v994 = vpop.f32.mrf.mxu0
    %v995 = vadd.f32 %v882, %v994
    %996 = vmatmul.f32.gmra.mxu0 %v933
    %v997 = vpop.f32.mrf.mxu0
    %v998 = vadd.f32 %v885, %v997
    %999 = vmatmul.f32.gmra.mxu0 %v936
    %v1000 = vpop.f32.mrf.mxu0
    %v1001 = vadd.f32 %v888, %v1000
    %1002 = vmatmul.f32.gmra.mxu0 %v939
    %v1003 = vpop.f32.mrf.mxu0
    %v1004 = vadd.f32 %v891, %v1003
    %1005 = vmatmul.f32.gmra.mxu0 %v942
    %v1006 = vpop.f32.mrf.mxu0
    %v1007 = vadd.f32 %v894, %v1006
    %1008 = vmatmul.f32.gmra.mxu0 %v945
    %v1009 = vpop.f32.mrf.mxu0
    %v1010 = vadd.f32 %v897, %v1009
    %1011 = vmatmul.f32.gmra.mxu0 %v948
    %v1012 = vpop.f32.mrf.mxu0
    %v1013 = vadd.f32 %v900, %v1012
    %1014 = vdwg.mxu0
    %v1015 = vmul.f32 %v968, %v590
    %v1016 = vmul.f32 %v971, %v600
    %v1017 = vmul.f32 %v974, %v610
    %v1018 = vmul.f32 %v977, %v620
    %v1019 = vmul.f32 %v980, %v630
    %v1020 = vmul.f32 %v983, %v640
    %v1021 = vmul.f32 %v986, %v650
    %v1022 = vmul.f32 %v989, %v660
    %v1023 = vmul.f32 %v992, %v670
    %v1024 = vmul.f32 %v995, %v680
    %v1025 = vmul.f32 %v998, %v690
    %v1026 = vmul.f32 %v1001, %v700
    %v1027 = vmul.f32 %v1004, %v710
    %v1028 = vmul.f32 %v1007, %v720
    %v1029 = vmul.f32 %v1010, %v730
    %v1030 = vmul.f32 %v1013, %v740
    %v1031 = vld [vmem:[%s4] sm:$0x1]
    %v1033 = vperm.slane %v1031, 0
    %v1035 = vadd.f32 %v1015, %v1033
    %v1036 = vadd.f32 %v1016, %v1033
    %v1037 = vadd.f32 %v1017, %v1033
    %v1038 = vadd.f32 %v1018, %v1033
    %v1039 = vadd.f32 %v1019, %v1033
    %v1040 = vadd.f32 %v1020, %v1033
    %v1041 = vadd.f32 %v1021, %v1033
    %v1042 = vadd.f32 %v1022, %v1033
    %v1043 = vadd.f32 %v1023, %v1033
    %v1044 = vadd.f32 %v1024, %v1033
    %v1045 = vadd.f32 %v1025, %v1033
    %v1046 = vadd.f32 %v1026, %v1033
    %v1047 = vadd.f32 %v1027, %v1033
    %v1048 = vadd.f32 %v1028, %v1033
    %v1049 = vadd.f32 %v1029, %v1033
    %v1050 = vadd.f32 %v1030, %v1033
    %1051 = vst [vmem:[#allocation4] sm:$0xff] %v1035
    %1052 = vst [vmem:[#allocation4 + $0x8] sm:$0xff] %v1036
    %1053 = vst [vmem:[#allocation4 + $0x10] sm:$0xff] %v1037
    %1054 = vst [vmem:[#allocation4 + $0x18] sm:$0xff] %v1038
    %1055 = vst [vmem:[#allocation4 + $0x20] sm:$0xff] %v1039
    %1056 = vst [vmem:[#allocation4 + $0x28] sm:$0xff] %v1040
    %1057 = vst [vmem:[#allocation4 + $0x30] sm:$0xff] %v1041
    %1058 = vst [vmem:[#allocation4 + $0x38] sm:$0xff] %v1042
    %1059 = vst [vmem:[#allocation4 + $0x40] sm:$0xff] %v1043
    %1060 = vst [vmem:[#allocation4 + $0x48] sm:$0xff] %v1044
    %1061 = vst [vmem:[#allocation4 + $0x50] sm:$0xff] %v1045
    %1062 = vst [vmem:[#allocation4 + $0x58] sm:$0xff] %v1046
    %1063 = vst [vmem:[#allocation4 + $0x60] sm:$0xff] %v1047
    %1064 = vst [vmem:[#allocation4 + $0x68] sm:$0xff] %v1048
    %1065 = vst [vmem:[#allocation4 + $0x70] sm:$0xff] %v1049
    %1066 = vst [vmem:[#allocation4 + $0x78] sm:$0xff] %v1050
    // Predicated region
    $region98: #{patch_merging.1} parent=1 // pred_check
      _
    $region99: #{patch_merging.1} parent=1 // pred_check_branch
      %1068 = sbr.rel (0) target = $region101
    $region100: #{patch_merging.1} parent=1 // pred_region
      %1070 = vsyncadd [#allocation5], 0
      %s1071 = sshll.u32 [#allocation4], 4
      %s1072 = int_to_ptr.vmem [resolvable:$true] %s1071
      %s1073 = sshll.u32 %s5, 4
      %s1074 = int_to_ptr.hbm [resolvable:$true] %s1073
      %1079 = dma.vmem_to_hbm [thread:$0]  %s1072, 2048, %s1074, [#allocation5], 128, 128, 8
    $region101: #{patch_merging.1} parent=1 // pred_fallthru
      _
    // Predicated region
    $region102: #{patch_merging.1} parent=1 // pred_check
      _
    $region103: #{patch_merging.1} parent=1 // pred_check_branch
      %1081 = sbr.rel (0) target = $region105
    $region104: #{patch_merging.1} parent=1 // pred_region
      %1083 = dma.done [#allocation5], 2048
    $region105: #{patch_merging.1} parent=1 // pred_fallthru
      _
    %1084 = vsyncpa [#allocation5], 1

</llo_original>
